<compile_context>
chip_gen: v5e
topology: v5e:2x2
jax: 0.10.0
libtpu: 0.0.40
codegen_flags: <defaults>
</compile_context>

<pallas_src>
import jax
import jax.numpy as jnp
from jax.experimental import pallas as pl
from jax.experimental.pallas import tpu as pltpu

BN_EPS = 1e-5


# ----------------------------- Pallas kernel --------------------------------------

def _fused_mlp_kernel(x_ref, w1_ref, b1_ref, w2_ref, b2_ref, mw_ref, mb_ref, out_ref):
    # One task-block per grid step.  All (task-in-block, view) groups are fused
    # into block-diagonal weights, so the whole step is exactly three dots.
    #   x_ref : (B_pad, G*SD)            G = tasks_per_block * num_views
    #   w1_ref: (1, G*SD, G*H1)          shared_bottom + Linear1 + BN1 folded
    #   b1_ref: (1, 1, G*H1)
    #   w2_ref: (1, G*H1, G*H2)          Linear2 + BN2 folded
    #   b2_ref: (1, 1, G*H2)
    #   mw_ref: (1, G*H2, TB*O_pad)      merge weights, block-diag over tasks, lane-padded
    #   mb_ref: (1, 1, TB*O_pad)
    #   out   : (B_pad, TB*O_pad)        lane-dense
    h1 = jnp.dot(x_ref[...], w1_ref[0], preferred_element_type=jnp.float32) + b1_ref[0]
    h1 = jnp.maximum(h1, 0.0)
    h2 = jnp.dot(h1, w2_ref[0], preferred_element_type=jnp.float32) + b2_ref[0]
    h2 = jnp.maximum(h2, 0.0)
    out_ref[...] = jnp.dot(h2, mw_ref[0], preferred_element_type=jnp.float32) + mb_ref[0]


# ----------------------------- parameter folding ----------------------------------

def fold_params(params, tasks_per_block=1, lane_pad=128):
    """Fold shared_bottom + eval-BN into the linears and pack them as
    block-diagonal slabs covering `tasks_per_block` tasks x all views."""
    sw = params["sw"][:, 0, :]                 # (V, D)
    sb = params["sb"]                          # (V, 1, 1)
    w1, b1 = params["w1"], params["b1"]        # (T,V,S,H1), (T,V,1,H1)
    w2, b2 = params["w2"], params["b2"]        # (T,V,H1,H2), (T,V,1,H2)

    scale1 = params["g1"] * jax.lax.rsqrt(params["v1"] + BN_EPS)   # (T,V,1,H1)
    scale2 = params["g2"] * jax.lax.rsqrt(params["v2"] + BN_EPS)   # (T,V,1,H2)

    T, V, S, H1 = w1.shape
    D = sw.shape[-1]
    H2 = w2.shape[-1]
    O = params["mw"].shape[-1]
    SD = S * D

    assert T % tasks_per_block == 0
    TB = tasks_per_block
    NB = T // TB                      # number of task blocks == grid size
    G = TB * V                        # (task-in-block, view) groups per block
    O_pad = max(lane_pad, ((O + lane_pad - 1) // lane_pad) * lane_pad)

    # Layer 1: fold shared_bottom (sw, sb) and BN1 into one K = S*D linear.
    w1s = w1 * scale1                                               # (T,V,S,H1)
    w1_eff = jnp.einsum("vd,tvsh->tvsdh", sw, w1s).reshape(T, V, SD, H1)
    w1_sum = jnp.sum(w1, axis=2, keepdims=True)                     # (T,V,1,H1)
    b1_eff = (b1 + sb[None] * w1_sum - params["m1"]) * scale1 + params["be1"]

    # Layer 2: fold BN2.
    w2_eff = w2 * scale2                                            # (T,V,H1,H2)
    b2_eff = (b2 - params["m2"]) * scale2 + params["be2"]           # (T,V,1,H2)

    # Block-diagonal packing over the G = TB*V groups inside a task block.
    eye_g = jnp.eye(G, dtype=jnp.float32)
    w1_g = w1_eff.reshape(NB, G, SD, H1)
    w2_g = w2_eff.reshape(NB, G, H1, H2)
    W1 = jnp.einsum("ngkh,gf->ngkfh", w1_g, eye_g).reshape(NB, G * SD, G * H1)
    W2 = jnp.einsum("ngkh,gf->ngkfh", w2_g, eye_g).reshape(NB, G * H1, G * H2)
    B1 = b1_eff[:, :, 0, :].reshape(NB, 1, G * H1)
    B2 = b2_eff[:, :, 0, :].reshape(NB, 1, G * H2)

    # Merge: block-diagonal over tasks within the block, lane-padded output.
    mw_pad = jnp.pad(params["mw"], ((0, 0), (0, 0), (0, O_pad - O)))   # (T, V*H2, O_pad)
    mb_pad = jnp.pad(params["mb"], ((0, 0), (0, 0), (0, O_pad - O)))   # (T, 1, O_pad)
    eye_t = jnp.eye(TB, dtype=jnp.float32)
    MW = jnp.einsum("njko,jf->njkfo",
                    mw_pad.reshape(NB, TB, V * H2, O_pad), eye_t
                    ).reshape(NB, TB * V * H2, TB * O_pad)
    MB = mb_pad.reshape(NB, 1, TB * O_pad)

    arrays = dict(w1=W1.astype(jnp.float32), b1=B1.astype(jnp.float32),
                  w2=W2.astype(jnp.float32), b2=B2.astype(jnp.float32),
                  mw=MW.astype(jnp.float32), mb=MB.astype(jnp.float32))
    meta = dict(T=T, V=V, S=S, D=D, H1=H1, H2=H2, O=O, O_pad=O_pad, TB=TB, NB=NB)
    return arrays, meta


# ----------------------------- forward factory -------------------------------------

def _tensorcores_per_chip():
    try:
        kind = jax.devices()[0].device_kind.lower()
    except Exception:
        return 1
    # v7x has 2 TensorCores per chip; v5e/v6e have 1.
    return 2 if "v7" in kind else 1


def build_forward(params, tasks_per_block=None):
    """Fold params once; return a jitted forward mirroring SemiSupMultiViewMLP.forward."""
    T = params["w1"].shape[0]
    if tasks_per_block is None:
        # Multi-TC (v7x): keep one task per grid step so the "parallel" task axis
        # is sharded across TensorCores.  Single-TC (v5e/v6e): collapse the grid.
        tasks_per_block = 1 if (_tensorcores_per_chip() > 1 and T > 1) else T
    arrays, meta = fold_params(params, tasks_per_block)

    Tn, V, S, D = meta["T"], meta["V"], meta["S"], meta["D"]
    H1, H2, O, O_pad = meta["H1"], meta["H2"], meta["O"], meta["O_pad"]
    TB, NB = meta["TB"], meta["NB"]
    SD = S * D
    G = TB * V

    def _run(x):
        # x: (B, T, V, S, D) float32
        B = x.shape[0]
        B_pad = max(8, ((B + 7) // 8) * 8)
        xf = x.reshape(B, Tn * V * SD)                  # free contiguous reshape
        if B_pad != B:
            xf = jnp.pad(xf, ((0, B_pad - B), (0, 0)))  # pad rows compute garbage, stripped below

        out = pl.pallas_call(
            _fused_mlp_kernel,
            grid=(NB,),
            in_specs=[
                pl.BlockSpec((B_pad, G * SD), lambda t: (0, t)),
                pl.BlockSpec((1, G * SD, G * H1), lambda t: (t, 0, 0)),
                pl.BlockSpec((1, 1, G * H1), lambda t: (t, 0, 0)),
                pl.BlockSpec((1, G * H1, G * H2), lambda t: (t, 0, 0)),
                pl.BlockSpec((1, 1, G * H2), lambda t: (t, 0, 0)),
                pl.BlockSpec((1, G * H2, TB * O_pad), lambda t: (t, 0, 0)),
                pl.BlockSpec((1, 1, TB * O_pad), lambda t: (t, 0, 0)),
            ],
            out_specs=pl.BlockSpec((B_pad, TB * O_pad), lambda t: (0, t)),
            out_shape=jax.ShapeDtypeStruct((B_pad, Tn * O_pad), jnp.float32),
            compiler_params=pltpu.CompilerParams(dimension_semantics=("parallel",)),
        )(xf, arrays["w1"], arrays["b1"], arrays["w2"], arrays["b2"],
          arrays["mw"], arrays["mb"])

        # (B_pad, T*O_pad) lane-dense -> (T, B, O): strip lane + batch padding.
        out = out.reshape(B_pad, Tn, O_pad)[:B, :, :O]
        return jnp.transpose(out, (1, 0, 2))

    # TODO(synk): for large batch, add a batch grid axis (tile B) so the x block
    # stays well under v7x's 64 MiB VMEM and real DMA/compute pipelining kicks in.

    @jax.jit
    def forward(sup_x, unsup_x=None):
        if unsup_x is None:
            return _run(sup_x), None
        bsz = sup_x.shape[0]
        x = jnp.concatenate([sup_x, unsup_x], axis=0)
        out = _run(x)
        return out[:, :bsz, :], out[:, bsz:, :]

    return forward


# ---------------- parameter init (deterministic, PyTorch-like shapes) -------------

def init_params(key, T, V, S, D, H1, H2, O):
    ks = list(jax.random.split(key, 16))

    def unif(k, shape, fan_in):
        bound = 1.0 / jnp.sqrt(jnp.asarray(fan_in, jnp.float32))
        return jax.random.uniform(k, shape, jnp.float32, -bound, bound)

    params = {
        # shared_bottom: per-view Linear(sensor_dim, 1)
        "sw": unif(ks[0], (V, 1, D), D),
        "sb": unif(ks[1], (V, 1, 1), D),
        # specific_views: per (task, view) Linear(S, H1)+BN(H1)+ReLU+Linear(H1, H2)+BN(H2)+ReLU
        "w1": unif(ks[2], (T, V, S, H1), S),
        "b1": unif(ks[3], (T, V, 1, H1), S),
        "g1": 1.0 + 0.1 * jax.random.normal(ks[4], (T, V, 1, H1), jnp.float32),
        "be1": 0.1 * jax.random.normal(ks[5], (T, V, 1, H1), jnp.float32),
        "m1": 0.1 * jax.random.normal(ks[6], (T, V, 1, H1), jnp.float32),
        "v1": 1.0 + 0.1 * jnp.abs(jax.random.normal(ks[7], (T, V, 1, H1), jnp.float32)),
        "w2": unif(ks[8], (T, V, H1, H2), H1),
        "b2": unif(ks[9], (T, V, 1, H2), H1),
        "g2": 1.0 + 0.1 * jax.random.normal(ks[10], (T, V, 1, H2), jnp.float32),
        "be2": 0.1 * jax.random.normal(ks[11], (T, V, 1, H2), jnp.float32),
        "m2": 0.1 * jax.random.normal(ks[12], (T, V, 1, H2), jnp.float32),
        "v2": 1.0 + 0.1 * jnp.abs(jax.random.normal(ks[13], (T, V, 1, H2), jnp.float32)),
        # merge_views: per-task Linear(V*H2, O)
        "mw": unif(ks[14], (T, V * H2, O), V * H2),
        "mb": unif(ks[15], (T, 1, O), V * H2),
    }
    return params


# ---------------- pure-JAX reference (unfolded params) for validation --------------

def reference(params, x):
    B, T, V, S, D = x.shape
    outs = []
    for t in range(T):
        feats = []
        for v in range(V):
            xv = x[:, t, v]
            sv = jnp.sum(xv * params["sw"][v], axis=-1) + params["sb"][v]
            h1 = sv @ params["w1"][t, v] + params["b1"][t, v]
            h1 = (h1 - params["m1"][t, v]) / jnp.sqrt(params["v1"][t, v] + BN_EPS) \
                 * params["g1"][t, v] + params["be1"][t, v]
            h1 = jnp.maximum(h1, 0.0)
            h2 = h1 @ params["w2"][t, v] + params["b2"][t, v]
            h2 = (h2 - params["m2"][t, v]) / jnp.sqrt(params["v2"][t, v] + BN_EPS) \
                 * params["g2"][t, v] + params["be2"][t, v]
            h2 = jnp.maximum(h2, 0.0)
            feats.append(h2)
        feat = jnp.concatenate(feats, axis=-1)
        outs.append(feat @ params["mw"][t] + params["mb"][t])
    return jnp.stack(outs, axis=0)


if __name__ == "__main__":
    key = jax.random.PRNGKey(0)
    bsz, unsup_bsz = 4, 2
    num_tasks, num_views = 2, 3
    seq_len, sensor_dim = 8, 16
    hidden_dim_1, hidden_dim_2, output_dim = 32, 16, 4

    params = init_params(key, num_tasks, num_views, seq_len, sensor_dim,
                         hidden_dim_1, hidden_dim_2, output_dim)
    kx, ku = jax.random.split(jax.random.fold_in(key, 1))
    sup_x = jax.random.normal(kx, (bsz, num_tasks, num_views, seq_len, sensor_dim),
                              jnp.float32)
    unsup_x = jax.random.normal(ku, (unsup_bsz, num_tasks, num_views, seq_len, sensor_dim),
                                jnp.float32)

    # Fold parameters ONCE; reuse the jitted forward across calls.
    forward = build_forward(params)

    # supervised-only path
    sup_out, none_out = forward(sup_x)
    jax.block_until_ready(sup_out)
    assert none_out is None
    ref_sup = reference(params, sup_x)
    assert jnp.allclose(sup_out, ref_sup, atol=1e-4, rtol=1e-4)

    # semi-supervised path
    sup_out2, unsup_out2 = forward(sup_x, unsup_x)
    jax.block_until_ready((sup_out2, unsup_out2))
    ref_all = reference(params, jnp.concatenate([sup_x, unsup_x], axis=0))
    assert jnp.allclose(sup_out2, ref_all[:, :bsz], atol=1e-4, rtol=1e-4)
    assert jnp.allclose(unsup_out2, ref_all[:, bsz:], atol=1e-4, rtol=1e-4)

    print("KERNEL_OK")
</pallas_src>

<mosaic_0001>
module attributes {stable_mosaic.version = 11 : i64} {
  func.func @_fused_mlp_kernel(%arg0: i32, %arg1: memref<8x768xf32, #tpu.memory_space<vmem>>, %arg2: memref<1x768x192xf32, #tpu.memory_space<vmem>>, %arg3: memref<1x1x192xf32, #tpu.memory_space<vmem>>, %arg4: memref<1x192x96xf32, #tpu.memory_space<vmem>>, %arg5: memref<1x1x96xf32, #tpu.memory_space<vmem>>, %arg6: memref<1x96x256xf32, #tpu.memory_space<vmem>>, %arg7: memref<1x1x256xf32, #tpu.memory_space<vmem>>, %arg8: memref<8x256xf32, #tpu.memory_space<vmem>>) attributes {dimension_semantics = [#tpu.dimension_semantics<parallel>], iteration_bounds = array<i64: 1>, scalar_prefetch = 0 : i64, scratch_operands = 0 : i64, tpu.core_type = #tpu.core_type<tc>, window_params = [{transform_indices = @transform_0, window_bounds = array<i64: 8, 768>}, {transform_indices = @transform_1, window_bounds = array<i64: 1, 768, 192>}, {transform_indices = @transform_2, window_bounds = array<i64: 1, 1, 192>}, {transform_indices = @transform_3, window_bounds = array<i64: 1, 192, 96>}, {transform_indices = @transform_4, window_bounds = array<i64: 1, 1, 96>}, {transform_indices = @transform_5, window_bounds = array<i64: 1, 96, 256>}, {transform_indices = @transform_6, window_bounds = array<i64: 1, 1, 256>}, {transform_indices = @transform_7, window_bounds = array<i64: 8, 256>}]} {
    %c0 = arith.constant 0 : index
    %c0_0 = arith.constant 0 : index
    %0 = vector.load %arg1[%c0, %c0_0] : memref<8x768xf32, #tpu.memory_space<vmem>>, vector<8x768xf32>
    %c0_1 = arith.constant 0 : index
    %c0_2 = arith.constant 0 : index
    %c0_3 = arith.constant 0 : index
    %1 = vector.load %arg2[%c0_1, %c0_2, %c0_3] : memref<1x768x192xf32, #tpu.memory_space<vmem>>, vector<1x768x192xf32>
    %2 = vector.shape_cast %1 : vector<1x768x192xf32> to vector<768x192xf32>
    %cst = arith.constant dense<0.000000e+00> : vector<8x192xf32>
    %3 = tpu.matmul %0, %2, %cst {dimension_numbers = #tpu.dot_dimension_numbers<[1], [0], [0], [1], [0, 0, 1, 1], [], []>} : vector<8x768xf32>, vector<768x192xf32>, vector<8x192xf32> -> vector<8x192xf32>
    %c0_4 = arith.constant 0 : index
    %c0_5 = arith.constant 0 : index
    %c0_6 = arith.constant 0 : index
    %4 = vector.load %arg3[%c0_4, %c0_5, %c0_6] : memref<1x1x192xf32, #tpu.memory_space<vmem>>, vector<1x1x192xf32>
    %5 = vector.shape_cast %4 : vector<1x1x192xf32> to vector<1x192xf32>
    %6 = vector.broadcast %5 : vector<1x192xf32> to vector<8x192xf32>
    %7 = arith.addf %3, %6 : vector<8x192xf32>
    %cst_7 = arith.constant 0.000000e+00 : f32
    %8 = vector.broadcast %cst_7 : f32 to vector<8x192xf32>
    %9 = arith.maximumf %7, %8 : vector<8x192xf32>
    %c0_8 = arith.constant 0 : index
    %c0_9 = arith.constant 0 : index
    %c0_10 = arith.constant 0 : index
    %10 = vector.load %arg4[%c0_8, %c0_9, %c0_10] : memref<1x192x96xf32, #tpu.memory_space<vmem>>, vector<1x192x96xf32>
    %11 = vector.shape_cast %10 : vector<1x192x96xf32> to vector<192x96xf32>
    %cst_11 = arith.constant dense<0.000000e+00> : vector<8x96xf32>
    %12 = tpu.matmul %9, %11, %cst_11 {dimension_numbers = #tpu.dot_dimension_numbers<[1], [0], [0], [1], [0, 0, 1, 1], [], []>} : vector<8x192xf32>, vector<192x96xf32>, vector<8x96xf32> -> vector<8x96xf32>
    %c0_12 = arith.constant 0 : index
    %c0_13 = arith.constant 0 : index
    %c0_14 = arith.constant 0 : index
    %13 = vector.load %arg5[%c0_12, %c0_13, %c0_14] : memref<1x1x96xf32, #tpu.memory_space<vmem>>, vector<1x1x96xf32>
    %14 = vector.shape_cast %13 : vector<1x1x96xf32> to vector<1x96xf32>
    %15 = vector.broadcast %14 : vector<1x96xf32> to vector<8x96xf32>
    %16 = arith.addf %12, %15 : vector<8x96xf32>
    %cst_15 = arith.constant 0.000000e+00 : f32
    %17 = vector.broadcast %cst_15 : f32 to vector<8x96xf32>
    %18 = arith.maximumf %16, %17 : vector<8x96xf32>
    %c0_16 = arith.constant 0 : index
    %c0_17 = arith.constant 0 : index
    %c0_18 = arith.constant 0 : index
    %19 = vector.load %arg6[%c0_16, %c0_17, %c0_18] : memref<1x96x256xf32, #tpu.memory_space<vmem>>, vector<1x96x256xf32>
    %20 = vector.shape_cast %19 : vector<1x96x256xf32> to vector<96x256xf32>
    %cst_19 = arith.constant dense<0.000000e+00> : vector<8x256xf32>
    %21 = tpu.matmul %18, %20, %cst_19 {dimension_numbers = #tpu.dot_dimension_numbers<[1], [0], [0], [1], [0, 0, 1, 1], [], []>} : vector<8x96xf32>, vector<96x256xf32>, vector<8x256xf32> -> vector<8x256xf32>
    %c0_20 = arith.constant 0 : index
    %c0_21 = arith.constant 0 : index
    %c0_22 = arith.constant 0 : index
    %22 = vector.load %arg7[%c0_20, %c0_21, %c0_22] : memref<1x1x256xf32, #tpu.memory_space<vmem>>, vector<1x1x256xf32>
    %23 = vector.shape_cast %22 : vector<1x1x256xf32> to vector<1x256xf32>
    %24 = vector.broadcast %23 : vector<1x256xf32> to vector<8x256xf32>
    %25 = arith.addf %21, %24 : vector<8x256xf32>
    %c0_23 = arith.constant 0 : index
    %c0_24 = arith.constant 0 : index
    %26 = vector.load %arg8[%c0_23, %c0_24] : memref<8x256xf32, #tpu.memory_space<vmem>>, vector<8x256xf32>
    tpu.vector_store %arg8[%c0_23, %c0_24], %25 {strides = array<i32>} : memref<8x256xf32, #tpu.memory_space<vmem>>, vector<8x256xf32>,
    return
  }
  func.func @transform_0(%arg0: i32) -> (i32, i32) {
    %c0_i32 = arith.constant 0 : i32
    %c0_i32_0 = arith.constant 0 : i32
    return %c0_i32, %arg0 : i32, i32
  }
  func.func @transform_1(%arg0: i32) -> (i32, i32, i32) {
    %c0_i32 = arith.constant 0 : i32
    %c0_i32_0 = arith.constant 0 : i32
    %c0_i32_1 = arith.constant 0 : i32
    return %arg0, %c0_i32, %c0_i32_0 : i32, i32, i32
  }
  func.func @transform_2(%arg0: i32) -> (i32, i32, i32) {
    %c0_i32 = arith.constant 0 : i32
    %c0_i32_0 = arith.constant 0 : i32
    %c0_i32_1 = arith.constant 0 : i32
    return %arg0, %c0_i32, %c0_i32_0 : i32, i32, i32
  }
  func.func @transform_3(%arg0: i32) -> (i32, i32, i32) {
    %c0_i32 = arith.constant 0 : i32
    %c0_i32_0 = arith.constant 0 : i32
    %c0_i32_1 = arith.constant 0 : i32
    return %arg0, %c0_i32, %c0_i32_0 : i32, i32, i32
  }
  func.func @transform_4(%arg0: i32) -> (i32, i32, i32) {
    %c0_i32 = arith.constant 0 : i32
    %c0_i32_0 = arith.constant 0 : i32
    %c0_i32_1 = arith.constant 0 : i32
    return %arg0, %c0_i32, %c0_i32_0 : i32, i32, i32
  }
  func.func @transform_5(%arg0: i32) -> (i32, i32, i32) {
    %c0_i32 = arith.constant 0 : i32
    %c0_i32_0 = arith.constant 0 : i32
    %c0_i32_1 = arith.constant 0 : i32
    return %arg0, %c0_i32, %c0_i32_0 : i32, i32, i32
  }
  func.func @transform_6(%arg0: i32) -> (i32, i32, i32) {
    %c0_i32 = arith.constant 0 : i32
    %c0_i32_0 = arith.constant 0 : i32
    %c0_i32_1 = arith.constant 0 : i32
    return %arg0, %c0_i32, %c0_i32_0 : i32, i32, i32
  }
  func.func @transform_7(%arg0: i32) -> (i32, i32) {
    %c0_i32 = arith.constant 0 : i32
    %c0_i32_0 = arith.constant 0 : i32
    return %c0_i32, %arg0 : i32, i32
  }
}

</mosaic_0001>

<llo_original>
// kernel: forward.1
$region0: #{forward.1}
  #allocation0 [shape = 'u32[]', space=smem, size = 0x4, offset = 0x4, fixed_abs, tag = 'smem constant byte address 0x4 - core index']
  #allocation1 [shape = 'u32[72,128]{1,0:T(1,128)}', space=vmem, size = 0x9000, scoped, tag = 'internal scratch']
  %s0 = inlined_call_operand.vmem [shape: f32[8,768], index: 0, kind: input, shape index: {}]
  %s1 = inlined_call_operand.hbm [shape: f32[1,768,192], index: 1, kind: input, shape index: {}]
  %s2 = inlined_call_operand.vmem [shape: f32[1,1,192], index: 2, kind: input, shape index: {}]
  %s3 = inlined_call_operand.hbm [shape: f32[1,192,96], index: 3, kind: input, shape index: {}]
  %s4 = inlined_call_operand.vmem [shape: f32[1,1,96], index: 4, kind: input, shape index: {}]
  %s5 = inlined_call_operand.vmem [shape: f32[1,96,256], index: 5, kind: input, shape index: {}]
  %s6 = inlined_call_operand.vmem [shape: f32[1,1,256], index: 6, kind: input, shape index: {}]
  %s7 = inlined_call_operand.vmem [shape: f32[8,256], index: 7, kind: output, shape index: {}]
  %s8 = sld [smem:[#allocation0]]
  $region46: #{forward.1} parent=0
    _
  %s10 = ssub.s32 1, %s8
  %s11 = scalar_select 0, %s10, %s8
  $region1: #{forward.1} parent=0
    #allocation2 [shape = 'u8[786432]{0}', space=vmem, size = 0xc0000, scoped, tag = 'input window, operand 1, single buffered']
    #allocation3 [shape = 's32[1]{0}', space=sflag, size = 0x4, scoped, tag = 'scoped memory for forward.1']
    #allocation4 [shape = 'u8[98304]{0}', space=vmem, size = 0x18000, scoped, tag = 'input window, operand 3, single buffered']
    #allocation5 [shape = 's32[1]{0}', space=sflag, size = 0x4, scoped, tag = 'scoped memory for forward.1']
    %12 = vsyncpa [#allocation3], 0
    %13 = vsyncpa [#allocation5], 0
    // Predicated region
    $region2: #{forward.1} parent=1 // pred_check
      _
    $region3: #{forward.1} parent=1 // pred_check_branch
      %15 = sbr.rel (0) target = $region5
    $region4: #{forward.1} parent=1 // pred_region
      _
    $region5: #{forward.1} parent=1 // pred_fallthru
      _
    // Predicated region
    $region6: #{forward.1} parent=1 // pred_check
      _
    $region7: #{forward.1} parent=1 // pred_check_branch
      %17 = sbr.rel (0) target = $region9
    $region8: #{forward.1} parent=1 // pred_region
      %19 = vsyncadd [#allocation3], 0
      %s20 = sshll.u32 %s1, 4
      %s21 = int_to_ptr.hbm [resolvable:$true] %s20
      %s22 = sshll.u32 [#allocation2], 4
      %s23 = int_to_ptr.vmem [resolvable:$true] %s22
      %28 = dma.hbm_to_vmem [thread:$0]  %s21, 24576, %s23, [#allocation3], 256, 256, 16
    $region9: #{forward.1} parent=1 // pred_fallthru
      _
    // Predicated region
    $region10: #{forward.1} parent=1 // pred_check
      _
    $region11: #{forward.1} parent=1 // pred_check_branch
      %30 = sbr.rel (0) target = $region13
    $region12: #{forward.1} parent=1 // pred_region
      _
    $region13: #{forward.1} parent=1 // pred_fallthru
      _
    // Predicated region
    $region14: #{forward.1} parent=1 // pred_check
      _
    $region15: #{forward.1} parent=1 // pred_check_branch
      %32 = sbr.rel (0) target = $region17
    $region16: #{forward.1} parent=1 // pred_region
      %34 = vsyncadd [#allocation5], 0
      %s35 = sshll.u32 %s3, 4
      %s36 = int_to_ptr.hbm [resolvable:$true] %s35
      %s37 = sshll.u32 [#allocation4], 4
      %s38 = int_to_ptr.vmem [resolvable:$true] %s37
      %43 = dma.hbm_to_vmem [thread:$0]  %s36, 3072, %s38, [#allocation5], 128, 128, 8
    $region17: #{forward.1} parent=1 // pred_fallthru
      _
    // Predicated region
    $region18: #{forward.1} parent=1 // pred_check
      _
    $region19: #{forward.1} parent=1 // pred_check_branch
      %45 = sbr.rel (0) target = $region21
    $region20: #{forward.1} parent=1 // pred_region
      _
    $region21: #{forward.1} parent=1 // pred_fallthru
      _
    // Predicated region
    $region22: #{forward.1} parent=1 // pred_check
      _
    $region23: #{forward.1} parent=1 // pred_check_branch
      %47 = sbr.rel (0) target = $region25
    $region24: #{forward.1} parent=1 // pred_region
      _
    $region25: #{forward.1} parent=1 // pred_fallthru
      _
    // Predicated region
    $region26: #{forward.1} parent=1 // pred_check
      _
    $region27: #{forward.1} parent=1 // pred_check_branch
      %49 = sbr.rel (0) target = $region29
    $region28: #{forward.1} parent=1 // pred_region
      _
    $region29: #{forward.1} parent=1 // pred_fallthru
      _
    // Predicated region
    $region30: #{forward.1} parent=1 // pred_check
      _
    $region31: #{forward.1} parent=1 // pred_check_branch
      %51 = sbr.rel (0) target = $region33
    $region32: #{forward.1} parent=1 // pred_region
      %53 = dma.done [#allocation3], 24576
    $region33: #{forward.1} parent=1 // pred_fallthru
      _
    // Predicated region
    $region34: #{forward.1} parent=1 // pred_check
      _
    $region35: #{forward.1} parent=1 // pred_check_branch
      %55 = sbr.rel (0) target = $region37
    $region36: #{forward.1} parent=1 // pred_region
      %57 = dma.done [#allocation5], 3072
    $region37: #{forward.1} parent=1 // pred_fallthru
      _
    %v58 = vld [vmem:[%s0] sm:$0xff]
    %v59 = vld [vmem:[%s0 + $0x8] sm:$0xff]
    %v60 = vld [vmem:[%s0 + $0x10] sm:$0xff]
    %v61 = vld [vmem:[%s0 + $0x18] sm:$0xff]
    %v62 = vld [vmem:[%s0 + $0x20] sm:$0xff]
    %v63 = vld [vmem:[%s0 + $0x28] sm:$0xff]
    %v64 = vld [vmem:[#allocation2] sm:$0xff]
    %v65 = vld [vmem:[#allocation2 + $0x8] sm:$0xff]
    %v66 = vld [vmem:[#allocation2 + $0x10] sm:$0xff]
    %v67 = vld [vmem:[#allocation2 + $0x18] sm:$0xff]
    %v68 = vld [vmem:[#allocation2 + $0x20] sm:$0xff]
    %v69 = vld [vmem:[#allocation2 + $0x28] sm:$0xff]
    %v70 = vld [vmem:[#allocation2 + $0x30] sm:$0xff]
    %v71 = vld [vmem:[#allocation2 + $0x38] sm:$0xff]
    %v72 = vld [vmem:[#allocation2 + $0x40] sm:$0xff]
    %v73 = vld [vmem:[#allocation2 + $0x48] sm:$0xff]
    %v74 = vld [vmem:[#allocation2 + $0x50] sm:$0xff]
    %v75 = vld [vmem:[#allocation2 + $0x58] sm:$0xff]
    %v76 = vld [vmem:[#allocation2 + $0x60] sm:$0xff]
    %v77 = vld [vmem:[#allocation2 + $0x68] sm:$0xff]
    %v78 = vld [vmem:[#allocation2 + $0x70] sm:$0xff]
    %v79 = vld [vmem:[#allocation2 + $0x78] sm:$0xff]
    %v80 = vld [vmem:[#allocation2 + $0x80] sm:$0xff]
    %v81 = vld [vmem:[#allocation2 + $0x88] sm:$0xff]
    %v82 = vld [vmem:[#allocation2 + $0x90] sm:$0xff]
    %v83 = vld [vmem:[#allocation2 + $0x98] sm:$0xff]
    %v84 = vld [vmem:[#allocation2 + $0xa0] sm:$0xff]
    %v85 = vld [vmem:[#allocation2 + $0xa8] sm:$0xff]
    %v86 = vld [vmem:[#allocation2 + $0xb0] sm:$0xff]
    %v87 = vld [vmem:[#allocation2 + $0xb8] sm:$0xff]
    %v88 = vld [vmem:[#allocation2 + $0xc0] sm:$0xff]
    %v89 = vld [vmem:[#allocation2 + $0xc8] sm:$0xff]
    %v90 = vld [vmem:[#allocation2 + $0xd0] sm:$0xff]
    %v91 = vld [vmem:[#allocation2 + $0xd8] sm:$0xff]
    %v92 = vld [vmem:[#allocation2 + $0xe0] sm:$0xff]
    %v93 = vld [vmem:[#allocation2 + $0xe8] sm:$0xff]
    %v94 = vld [vmem:[#allocation2 + $0xf0] sm:$0xff]
    %v95 = vld [vmem:[#allocation2 + $0xf8] sm:$0xff]
    %v96 = vld [vmem:[#allocation2 + $0x100] sm:$0xff]
    %v97 = vld [vmem:[#allocation2 + $0x108] sm:$0xff]
    %v98 = vld [vmem:[#allocation2 + $0x110] sm:$0xff]
    %v99 = vld [vmem:[#allocation2 + $0x118] sm:$0xff]
    %v100 = vld [vmem:[#allocation2 + $0x120] sm:$0xff]
    %v101 = vld [vmem:[#allocation2 + $0x128] sm:$0xff]
    %v102 = vld [vmem:[#allocation2 + $0x130] sm:$0xff]
    %v103 = vld [vmem:[#allocation2 + $0x138] sm:$0xff]
    %v104 = vld [vmem:[#allocation2 + $0x140] sm:$0xff]
    %v105 = vld [vmem:[#allocation2 + $0x148] sm:$0xff]
    %v106 = vld [vmem:[#allocation2 + $0x150] sm:$0xff]
    %v107 = vld [vmem:[#allocation2 + $0x158] sm:$0xff]
    %v108 = vld [vmem:[#allocation2 + $0x160] sm:$0xff]
    %v109 = vld [vmem:[#allocation2 + $0x168] sm:$0xff]
    %v110 = vld [vmem:[#allocation2 + $0x170] sm:$0xff]
    %v111 = vld [vmem:[#allocation2 + $0x178] sm:$0xff]
    %v112 = vld [vmem:[#allocation2 + $0x180] sm:$0xff]
    %v113 = vld [vmem:[#allocation2 + $0x188] sm:$0xff]
    %v114 = vld [vmem:[#allocation2 + $0x190] sm:$0xff]
    %v115 = vld [vmem:[#allocation2 + $0x198] sm:$0xff]
    %v116 = vld [vmem:[#allocation2 + $0x1a0] sm:$0xff]
    %v117 = vld [vmem:[#allocation2 + $0x1a8] sm:$0xff]
    %v118 = vld [vmem:[#allocation2 + $0x1b0] sm:$0xff]
    %v119 = vld [vmem:[#allocation2 + $0x1b8] sm:$0xff]
    %v120 = vld [vmem:[#allocation2 + $0x1c0] sm:$0xff]
    %v121 = vld [vmem:[#allocation2 + $0x1c8] sm:$0xff]
    %v122 = vld [vmem:[#allocation2 + $0x1d0] sm:$0xff]
    %v123 = vld [vmem:[#allocation2 + $0x1d8] sm:$0xff]
    %v124 = vld [vmem:[#allocation2 + $0x1e0] sm:$0xff]
    %v125 = vld [vmem:[#allocation2 + $0x1e8] sm:$0xff]
    %v126 = vld [vmem:[#allocation2 + $0x1f0] sm:$0xff]
    %v127 = vld [vmem:[#allocation2 + $0x1f8] sm:$0xff]
    %v128 = vld [vmem:[#allocation2 + $0x200] sm:$0xff]
    %v129 = vld [vmem:[#allocation2 + $0x208] sm:$0xff]
    %v130 = vld [vmem:[#allocation2 + $0x210] sm:$0xff]
    %v131 = vld [vmem:[#allocation2 + $0x218] sm:$0xff]
    %v132 = vld [vmem:[#allocation2 + $0x220] sm:$0xff]
    %v133 = vld [vmem:[#allocation2 + $0x228] sm:$0xff]
    %v134 = vld [vmem:[#allocation2 + $0x230] sm:$0xff]
    %v135 = vld [vmem:[#allocation2 + $0x238] sm:$0xff]
    %v136 = vld [vmem:[#allocation2 + $0x240] sm:$0xff]
    %v137 = vld [vmem:[#allocation2 + $0x248] sm:$0xff]
    %v138 = vld [vmem:[#allocation2 + $0x250] sm:$0xff]
    %v139 = vld [vmem:[#allocation2 + $0x258] sm:$0xff]
    %v140 = vld [vmem:[#allocation2 + $0x260] sm:$0xff]
    %v141 = vld [vmem:[#allocation2 + $0x268] sm:$0xff]
    %v142 = vld [vmem:[#allocation2 + $0x270] sm:$0xff]
    %v143 = vld [vmem:[#allocation2 + $0x278] sm:$0xff]
    %v144 = vld [vmem:[#allocation2 + $0x280] sm:$0xff]
    %v145 = vld [vmem:[#allocation2 + $0x288] sm:$0xff]
    %v146 = vld [vmem:[#allocation2 + $0x290] sm:$0xff]
    %v147 = vld [vmem:[#allocation2 + $0x298] sm:$0xff]
    %v148 = vld [vmem:[#allocation2 + $0x2a0] sm:$0xff]
    %v149 = vld [vmem:[#allocation2 + $0x2a8] sm:$0xff]
    %v150 = vld [vmem:[#allocation2 + $0x2b0] sm:$0xff]
    %v151 = vld [vmem:[#allocation2 + $0x2b8] sm:$0xff]
    %v152 = vld [vmem:[#allocation2 + $0x2c0] sm:$0xff]
    %v153 = vld [vmem:[#allocation2 + $0x2c8] sm:$0xff]
    %v154 = vld [vmem:[#allocation2 + $0x2d0] sm:$0xff]
    %v155 = vld [vmem:[#allocation2 + $0x2d8] sm:$0xff]
    %v156 = vld [vmem:[#allocation2 + $0x2e0] sm:$0xff]
    %v157 = vld [vmem:[#allocation2 + $0x2e8] sm:$0xff]
    %v158 = vld [vmem:[#allocation2 + $0x2f0] sm:$0xff]
    %v159 = vld [vmem:[#allocation2 + $0x2f8] sm:$0xff]
    %v160 = vld [vmem:[#allocation2 + $0x300] sm:$0xff]
    %v161 = vld [vmem:[#allocation2 + $0x308] sm:$0xff]
    %v162 = vld [vmem:[#allocation2 + $0x310] sm:$0xff]
    %v163 = vld [vmem:[#allocation2 + $0x318] sm:$0xff]
    %v164 = vld [vmem:[#allocation2 + $0x320] sm:$0xff]
    %v165 = vld [vmem:[#allocation2 + $0x328] sm:$0xff]
    %v166 = vld [vmem:[#allocation2 + $0x330] sm:$0xff]
    %v167 = vld [vmem:[#allocation2 + $0x338] sm:$0xff]
    %v168 = vld [vmem:[#allocation2 + $0x340] sm:$0xff]
    %v169 = vld [vmem:[#allocation2 + $0x348] sm:$0xff]
    %v170 = vld [vmem:[#allocation2 + $0x350] sm:$0xff]
    %v171 = vld [vmem:[#allocation2 + $0x358] sm:$0xff]
    %v172 = vld [vmem:[#allocation2 + $0x360] sm:$0xff]
    %v173 = vld [vmem:[#allocation2 + $0x368] sm:$0xff]
    %v174 = vld [vmem:[#allocation2 + $0x370] sm:$0xff]
    %v175 = vld [vmem:[#allocation2 + $0x378] sm:$0xff]
    %v176 = vld [vmem:[#allocation2 + $0x380] sm:$0xff]
    %v177 = vld [vmem:[#allocation2 + $0x388] sm:$0xff]
    %v178 = vld [vmem:[#allocation2 + $0x390] sm:$0xff]
    %v179 = vld [vmem:[#allocation2 + $0x398] sm:$0xff]
    %v180 = vld [vmem:[#allocation2 + $0x3a0] sm:$0xff]
    %v181 = vld [vmem:[#allocation2 + $0x3a8] sm:$0xff]
    %v182 = vld [vmem:[#allocation2 + $0x3b0] sm:$0xff]
    %v183 = vld [vmem:[#allocation2 + $0x3b8] sm:$0xff]
    %v184 = vld [vmem:[#allocation2 + $0x3c0] sm:$0xff]
    %v185 = vld [vmem:[#allocation2 + $0x3c8] sm:$0xff]
    %v186 = vld [vmem:[#allocation2 + $0x3d0] sm:$0xff]
    %v187 = vld [vmem:[#allocation2 + $0x3d8] sm:$0xff]
    %v188 = vld [vmem:[#allocation2 + $0x3e0] sm:$0xff]
    %v189 = vld [vmem:[#allocation2 + $0x3e8] sm:$0xff]
    %v190 = vld [vmem:[#allocation2 + $0x3f0] sm:$0xff]
    %v191 = vld [vmem:[#allocation2 + $0x3f8] sm:$0xff]
    %v192 = vld [vmem:[#allocation2 + $0x400] sm:$0xff]
    %v193 = vld [vmem:[#allocation2 + $0x408] sm:$0xff]
    %v194 = vld [vmem:[#allocation2 + $0x410] sm:$0xff]
    %v195 = vld [vmem:[#allocation2 + $0x418] sm:$0xff]
    %v196 = vld [vmem:[#allocation2 + $0x420] sm:$0xff]
    %v197 = vld [vmem:[#allocation2 + $0x428] sm:$0xff]
    %v198 = vld [vmem:[#allocation2 + $0x430] sm:$0xff]
    %v199 = vld [vmem:[#allocation2 + $0x438] sm:$0xff]
    %v200 = vld [vmem:[#allocation2 + $0x440] sm:$0xff]
    %v201 = vld [vmem:[#allocation2 + $0x448] sm:$0xff]
    %v202 = vld [vmem:[#allocation2 + $0x450] sm:$0xff]
    %v203 = vld [vmem:[#allocation2 + $0x458] sm:$0xff]
    %v204 = vld [vmem:[#allocation2 + $0x460] sm:$0xff]
    %v205 = vld [vmem:[#allocation2 + $0x468] sm:$0xff]
    %v206 = vld [vmem:[#allocation2 + $0x470] sm:$0xff]
    %v207 = vld [vmem:[#allocation2 + $0x478] sm:$0xff]
    %v208 = vld [vmem:[#allocation2 + $0x480] sm:$0xff]
    %v209 = vld [vmem:[#allocation2 + $0x488] sm:$0xff]
    %v210 = vld [vmem:[#allocation2 + $0x490] sm:$0xff]
    %v211 = vld [vmem:[#allocation2 + $0x498] sm:$0xff]
    %v212 = vld [vmem:[#allocation2 + $0x4a0] sm:$0xff]
    %v213 = vld [vmem:[#allocation2 + $0x4a8] sm:$0xff]
    %v214 = vld [vmem:[#allocation2 + $0x4b0] sm:$0xff]
    %v215 = vld [vmem:[#allocation2 + $0x4b8] sm:$0xff]
    %v216 = vld [vmem:[#allocation2 + $0x4c0] sm:$0xff]
    %v217 = vld [vmem:[#allocation2 + $0x4c8] sm:$0xff]
    %v218 = vld [vmem:[#allocation2 + $0x4d0] sm:$0xff]
    %v219 = vld [vmem:[#allocation2 + $0x4d8] sm:$0xff]
    %v220 = vld [vmem:[#allocation2 + $0x4e0] sm:$0xff]
    %v221 = vld [vmem:[#allocation2 + $0x4e8] sm:$0xff]
    %v222 = vld [vmem:[#allocation2 + $0x4f0] sm:$0xff]
    %v223 = vld [vmem:[#allocation2 + $0x4f8] sm:$0xff]
    %v224 = vld [vmem:[#allocation2 + $0x500] sm:$0xff]
    %v225 = vld [vmem:[#allocation2 + $0x508] sm:$0xff]
    %v226 = vld [vmem:[#allocation2 + $0x510] sm:$0xff]
    %v227 = vld [vmem:[#allocation2 + $0x518] sm:$0xff]
    %v228 = vld [vmem:[#allocation2 + $0x520] sm:$0xff]
    %v229 = vld [vmem:[#allocation2 + $0x528] sm:$0xff]
    %v230 = vld [vmem:[#allocation2 + $0x530] sm:$0xff]
    %v231 = vld [vmem:[#allocation2 + $0x538] sm:$0xff]
    %v232 = vld [vmem:[#allocation2 + $0x540] sm:$0xff]
    %v233 = vld [vmem:[#allocation2 + $0x548] sm:$0xff]
    %v234 = vld [vmem:[#allocation2 + $0x550] sm:$0xff]
    %v235 = vld [vmem:[#allocation2 + $0x558] sm:$0xff]
    %v236 = vld [vmem:[#allocation2 + $0x560] sm:$0xff]
    %v237 = vld [vmem:[#allocation2 + $0x568] sm:$0xff]
    %v238 = vld [vmem:[#allocation2 + $0x570] sm:$0xff]
    %v239 = vld [vmem:[#allocation2 + $0x578] sm:$0xff]
    %v240 = vld [vmem:[#allocation2 + $0x580] sm:$0xff]
    %v241 = vld [vmem:[#allocation2 + $0x588] sm:$0xff]
    %v242 = vld [vmem:[#allocation2 + $0x590] sm:$0xff]
    %v243 = vld [vmem:[#allocation2 + $0x598] sm:$0xff]
    %v244 = vld [vmem:[#allocation2 + $0x5a0] sm:$0xff]
    %v245 = vld [vmem:[#allocation2 + $0x5a8] sm:$0xff]
    %v246 = vld [vmem:[#allocation2 + $0x5b0] sm:$0xff]
    %v247 = vld [vmem:[#allocation2 + $0x5b8] sm:$0xff]
    %v248 = vld [vmem:[#allocation2 + $0x5c0] sm:$0xff]
    %v249 = vld [vmem:[#allocation2 + $0x5c8] sm:$0xff]
    %v250 = vld [vmem:[#allocation2 + $0x5d0] sm:$0xff]
    %v251 = vld [vmem:[#allocation2 + $0x5d8] sm:$0xff]
    %v252 = vld [vmem:[#allocation2 + $0x5e0] sm:$0xff]
    %v253 = vld [vmem:[#allocation2 + $0x5e8] sm:$0xff]
    %v254 = vld [vmem:[#allocation2 + $0x5f0] sm:$0xff]
    %v255 = vld [vmem:[#allocation2 + $0x5f8] sm:$0xff]
    %v256 = vld [vmem:[%s2] sm:$0x3]
    %v258 = vperm.slane %v256, 0
    %v259 = vperm.slane %v256, 1
    %262 = vmatpush.msra.mxu0 %v94
    %263 = vmatpush.msra.mxu0 %v92
    %264 = vmatpush.msra.mxu0 %v90
    %265 = vmatpush.msra.mxu0 %v88
    %266 = vmatpush.msra.mxu0 %v86
    %267 = vmatpush.msra.mxu0 %v84
    %268 = vmatpush.msra.mxu0 %v82
    %269 = vmatpush.msra.mxu0 %v80
    %270 = vmatpush.msra.mxu0 %v78
    %271 = vmatpush.msra.mxu0 %v76
    %272 = vmatpush.msra.mxu0 %v74
    %273 = vmatpush.msra.mxu0 %v72
    %274 = vmatpush.msra.mxu0 %v70
    %275 = vmatpush.msra.mxu0 %v68
    %276 = vmatpush.msra.mxu0 %v66
    %277 = vmatpush.msra.mxu0 %v64
    %278 = vmatmul.f32.gmra.mxu0 %v58
    %v279 = vpop.f32.mrf.mxu0
    %v280 = vadd.f32 %v258, %v279
    %281 = vdwg.mxu0
    %282 = vmatpush.msra.mxu0 %v126
    %283 = vmatpush.msra.mxu0 %v124
    %284 = vmatpush.msra.mxu0 %v122
    %285 = vmatpush.msra.mxu0 %v120
    %286 = vmatpush.msra.mxu0 %v118
    %287 = vmatpush.msra.mxu0 %v116
    %288 = vmatpush.msra.mxu0 %v114
    %289 = vmatpush.msra.mxu0 %v112
    %290 = vmatpush.msra.mxu0 %v110
    %291 = vmatpush.msra.mxu0 %v108
    %292 = vmatpush.msra.mxu0 %v106
    %293 = vmatpush.msra.mxu0 %v104
    %294 = vmatpush.msra.mxu0 %v102
    %295 = vmatpush.msra.mxu0 %v100
    %296 = vmatpush.msra.mxu0 %v98
    %297 = vmatpush.msra.mxu0 %v96
    %298 = vmatmul.f32.gmra.mxu0 %v59
    %v299 = vpop.f32.mrf.mxu0
    %v300 = vadd.f32 %v280, %v299
    %301 = vdwg.mxu0
    %302 = vmatpush.msra.mxu0 %v158
    %303 = vmatpush.msra.mxu0 %v156
    %304 = vmatpush.msra.mxu0 %v154
    %305 = vmatpush.msra.mxu0 %v152
    %306 = vmatpush.msra.mxu0 %v150
    %307 = vmatpush.msra.mxu0 %v148
    %308 = vmatpush.msra.mxu0 %v146
    %309 = vmatpush.msra.mxu0 %v144
    %310 = vmatpush.msra.mxu0 %v142
    %311 = vmatpush.msra.mxu0 %v140
    %312 = vmatpush.msra.mxu0 %v138
    %313 = vmatpush.msra.mxu0 %v136
    %314 = vmatpush.msra.mxu0 %v134
    %315 = vmatpush.msra.mxu0 %v132
    %316 = vmatpush.msra.mxu0 %v130
    %317 = vmatpush.msra.mxu0 %v128
    %318 = vmatmul.f32.gmra.mxu0 %v60
    %v319 = vpop.f32.mrf.mxu0
    %v320 = vadd.f32 %v300, %v319
    %321 = vdwg.mxu0
    %322 = vmatpush.msra.mxu0 %v190
    %323 = vmatpush.msra.mxu0 %v188
    %324 = vmatpush.msra.mxu0 %v186
    %325 = vmatpush.msra.mxu0 %v184
    %326 = vmatpush.msra.mxu0 %v182
    %327 = vmatpush.msra.mxu0 %v180
    %328 = vmatpush.msra.mxu0 %v178
    %329 = vmatpush.msra.mxu0 %v176
    %330 = vmatpush.msra.mxu0 %v174
    %331 = vmatpush.msra.mxu0 %v172
    %332 = vmatpush.msra.mxu0 %v170
    %333 = vmatpush.msra.mxu0 %v168
    %334 = vmatpush.msra.mxu0 %v166
    %335 = vmatpush.msra.mxu0 %v164
    %336 = vmatpush.msra.mxu0 %v162
    %337 = vmatpush.msra.mxu0 %v160
    %338 = vmatmul.f32.gmra.mxu0 %v61
    %v339 = vpop.f32.mrf.mxu0
    %v340 = vadd.f32 %v320, %v339
    %341 = vdwg.mxu0
    %342 = vmatpush.msra.mxu0 %v222
    %343 = vmatpush.msra.mxu0 %v220
    %344 = vmatpush.msra.mxu0 %v218
    %345 = vmatpush.msra.mxu0 %v216
    %346 = vmatpush.msra.mxu0 %v214
    %347 = vmatpush.msra.mxu0 %v212
    %348 = vmatpush.msra.mxu0 %v210
    %349 = vmatpush.msra.mxu0 %v208
    %350 = vmatpush.msra.mxu0 %v206
    %351 = vmatpush.msra.mxu0 %v204
    %352 = vmatpush.msra.mxu0 %v202
    %353 = vmatpush.msra.mxu0 %v200
    %354 = vmatpush.msra.mxu0 %v198
    %355 = vmatpush.msra.mxu0 %v196
    %356 = vmatpush.msra.mxu0 %v194
    %357 = vmatpush.msra.mxu0 %v192
    %358 = vmatmul.f32.gmra.mxu0 %v62
    %v359 = vpop.f32.mrf.mxu0
    %v360 = vadd.f32 %v340, %v359
    %361 = vdwg.mxu0
    %362 = vmatpush.msra.mxu0 %v254
    %363 = vmatpush.msra.mxu0 %v252
    %364 = vmatpush.msra.mxu0 %v250
    %365 = vmatpush.msra.mxu0 %v248
    %366 = vmatpush.msra.mxu0 %v246
    %367 = vmatpush.msra.mxu0 %v244
    %368 = vmatpush.msra.mxu0 %v242
    %369 = vmatpush.msra.mxu0 %v240
    %370 = vmatpush.msra.mxu0 %v238
    %371 = vmatpush.msra.mxu0 %v236
    %372 = vmatpush.msra.mxu0 %v234
    %373 = vmatpush.msra.mxu0 %v232
    %374 = vmatpush.msra.mxu0 %v230
    %375 = vmatpush.msra.mxu0 %v228
    %376 = vmatpush.msra.mxu0 %v226
    %377 = vmatpush.msra.mxu0 %v224
    %378 = vmatmul.f32.gmra.mxu0 %v63
    %v379 = vpop.f32.mrf.mxu0
    %v380 = vadd.f32 %v360, %v379
    %381 = vdwg.mxu0
    %382 = vmatpush.msra.mxu0 %v95
    %383 = vmatpush.msra.mxu0 %v93
    %384 = vmatpush.msra.mxu0 %v91
    %385 = vmatpush.msra.mxu0 %v89
    %386 = vmatpush.msra.mxu0 %v87
    %387 = vmatpush.msra.mxu0 %v85
    %388 = vmatpush.msra.mxu0 %v83
    %389 = vmatpush.msra.mxu0 %v81
    %390 = vmatpush.msra.mxu0 %v79
    %391 = vmatpush.msra.mxu0 %v77
    %392 = vmatpush.msra.mxu0 %v75
    %393 = vmatpush.msra.mxu0 %v73
    %394 = vmatpush.msra.mxu0 %v71
    %395 = vmatpush.msra.mxu0 %v69
    %396 = vmatpush.msra.mxu0 %v67
    %397 = vmatpush.msra.mxu0 %v65
    %398 = vmatmul.f32.gmra.mxu0 %v58
    %v399 = vpop.f32.mrf.mxu0
    %v400 = vadd.f32 %v259, %v399
    %401 = vdwg.mxu0
    %402 = vmatpush.msra.mxu0 %v127
    %403 = vmatpush.msra.mxu0 %v125
    %404 = vmatpush.msra.mxu0 %v123
    %405 = vmatpush.msra.mxu0 %v121
    %406 = vmatpush.msra.mxu0 %v119
    %407 = vmatpush.msra.mxu0 %v117
    %408 = vmatpush.msra.mxu0 %v115
    %409 = vmatpush.msra.mxu0 %v113
    %410 = vmatpush.msra.mxu0 %v111
    %411 = vmatpush.msra.mxu0 %v109
    %412 = vmatpush.msra.mxu0 %v107
    %413 = vmatpush.msra.mxu0 %v105
    %414 = vmatpush.msra.mxu0 %v103
    %415 = vmatpush.msra.mxu0 %v101
    %416 = vmatpush.msra.mxu0 %v99
    %417 = vmatpush.msra.mxu0 %v97
    %418 = vmatmul.f32.gmra.mxu0 %v59
    %v419 = vpop.f32.mrf.mxu0
    %v420 = vadd.f32 %v400, %v419
    %421 = vdwg.mxu0
    %422 = vmatpush.msra.mxu0 %v159
    %423 = vmatpush.msra.mxu0 %v157
    %424 = vmatpush.msra.mxu0 %v155
    %425 = vmatpush.msra.mxu0 %v153
    %426 = vmatpush.msra.mxu0 %v151
    %427 = vmatpush.msra.mxu0 %v149
    %428 = vmatpush.msra.mxu0 %v147
    %429 = vmatpush.msra.mxu0 %v145
    %430 = vmatpush.msra.mxu0 %v143
    %431 = vmatpush.msra.mxu0 %v141
    %432 = vmatpush.msra.mxu0 %v139
    %433 = vmatpush.msra.mxu0 %v137
    %434 = vmatpush.msra.mxu0 %v135
    %435 = vmatpush.msra.mxu0 %v133
    %436 = vmatpush.msra.mxu0 %v131
    %437 = vmatpush.msra.mxu0 %v129
    %438 = vmatmul.f32.gmra.mxu0 %v60
    %v439 = vpop.f32.mrf.mxu0
    %v440 = vadd.f32 %v420, %v439
    %441 = vdwg.mxu0
    %442 = vmatpush.msra.mxu0 %v191
    %443 = vmatpush.msra.mxu0 %v189
    %444 = vmatpush.msra.mxu0 %v187
    %445 = vmatpush.msra.mxu0 %v185
    %446 = vmatpush.msra.mxu0 %v183
    %447 = vmatpush.msra.mxu0 %v181
    %448 = vmatpush.msra.mxu0 %v179
    %449 = vmatpush.msra.mxu0 %v177
    %450 = vmatpush.msra.mxu0 %v175
    %451 = vmatpush.msra.mxu0 %v173
    %452 = vmatpush.msra.mxu0 %v171
    %453 = vmatpush.msra.mxu0 %v169
    %454 = vmatpush.msra.mxu0 %v167
    %455 = vmatpush.msra.mxu0 %v165
    %456 = vmatpush.msra.mxu0 %v163
    %457 = vmatpush.msra.mxu0 %v161
    %458 = vmatmul.f32.gmra.mxu0 %v61
    %v459 = vpop.f32.mrf.mxu0
    %v460 = vadd.f32 %v440, %v459
    %461 = vdwg.mxu0
    %462 = vmatpush.msra.mxu0 %v223
    %463 = vmatpush.msra.mxu0 %v221
    %464 = vmatpush.msra.mxu0 %v219
    %465 = vmatpush.msra.mxu0 %v217
    %466 = vmatpush.msra.mxu0 %v215
    %467 = vmatpush.msra.mxu0 %v213
    %468 = vmatpush.msra.mxu0 %v211
    %469 = vmatpush.msra.mxu0 %v209
    %470 = vmatpush.msra.mxu0 %v207
    %471 = vmatpush.msra.mxu0 %v205
    %472 = vmatpush.msra.mxu0 %v203
    %473 = vmatpush.msra.mxu0 %v201
    %474 = vmatpush.msra.mxu0 %v199
    %475 = vmatpush.msra.mxu0 %v197
    %476 = vmatpush.msra.mxu0 %v195
    %477 = vmatpush.msra.mxu0 %v193
    %478 = vmatmul.f32.gmra.mxu0 %v62
    %v479 = vpop.f32.mrf.mxu0
    %v480 = vadd.f32 %v460, %v479
    %481 = vdwg.mxu0
    %482 = vmatpush.msra.mxu0 %v255
    %483 = vmatpush.msra.mxu0 %v253
    %484 = vmatpush.msra.mxu0 %v251
    %485 = vmatpush.msra.mxu0 %v249
    %486 = vmatpush.msra.mxu0 %v247
    %487 = vmatpush.msra.mxu0 %v245
    %488 = vmatpush.msra.mxu0 %v243
    %489 = vmatpush.msra.mxu0 %v241
    %490 = vmatpush.msra.mxu0 %v239
    %491 = vmatpush.msra.mxu0 %v237
    %492 = vmatpush.msra.mxu0 %v235
    %493 = vmatpush.msra.mxu0 %v233
    %494 = vmatpush.msra.mxu0 %v231
    %495 = vmatpush.msra.mxu0 %v229
    %496 = vmatpush.msra.mxu0 %v227
    %497 = vmatpush.msra.mxu0 %v225
    %498 = vmatmul.f32.gmra.mxu0 %v63
    %v499 = vpop.f32.mrf.mxu0
    %v500 = vadd.f32 %v480, %v499
    %501 = vdwg.mxu0
    %v502 = vmax.f32 %v380, 0.0
    %v503 = vmax.f32 %v500, 0.0
    %v504 = vld [vmem:[#allocation4] sm:$0xff]
    %v505 = vld [vmem:[#allocation4 + $0x8] sm:$0xff]
    %v506 = vld [vmem:[#allocation4 + $0x10] sm:$0xff]
    %v507 = vld [vmem:[#allocation4 + $0x18] sm:$0xff]
    %v508 = vld [vmem:[#allocation4 + $0x20] sm:$0xff]
    %v509 = vld [vmem:[#allocation4 + $0x28] sm:$0xff]
    %v510 = vld [vmem:[#allocation4 + $0x30] sm:$0xff]
    %v511 = vld [vmem:[#allocation4 + $0x38] sm:$0xff]
    %v512 = vld [vmem:[#allocation4 + $0x40] sm:$0xff]
    %v513 = vld [vmem:[#allocation4 + $0x48] sm:$0xff]
    %v514 = vld [vmem:[#allocation4 + $0x50] sm:$0xff]
    %v515 = vld [vmem:[#allocation4 + $0x58] sm:$0xff]
    %v516 = vld [vmem:[#allocation4 + $0x60] sm:$0xff]
    %v517 = vld [vmem:[#allocation4 + $0x68] sm:$0xff]
    %v518 = vld [vmem:[#allocation4 + $0x70] sm:$0xff]
    %v519 = vld [vmem:[#allocation4 + $0x78] sm:$0xff]
    %v520 = vld [vmem:[#allocation4 + $0x80] sm:$0xff]
    %v521 = vld [vmem:[#allocation4 + $0x88] sm:$0xff]
    %v522 = vld [vmem:[#allocation4 + $0x90] sm:$0xff]
    %v523 = vld [vmem:[#allocation4 + $0x98] sm:$0xff]
    %v524 = vld [vmem:[#allocation4 + $0xa0] sm:$0xff]
    %v525 = vld [vmem:[#allocation4 + $0xa8] sm:$0xff]
    %v526 = vld [vmem:[#allocation4 + $0xb0] sm:$0xff]
    %v527 = vld [vmem:[#allocation4 + $0xb8] sm:$0xff]
    %v528 = vld [vmem:[%s4] sm:$0x1]
    %v530 = vperm.slane %v528, 0
    %vm532 = vcmask 523264
    %v534 = vsel %vm532, %v503, 0
    %536 = vmatpush.msra.mxu0 %v519
    %537 = vmatpush.msra.mxu0 %v518
    %538 = vmatpush.msra.mxu0 %v517
    %539 = vmatpush.msra.mxu0 %v516
    %540 = vmatpush.msra.mxu0 %v515
    %541 = vmatpush.msra.mxu0 %v514
    %542 = vmatpush.msra.mxu0 %v513
    %543 = vmatpush.msra.mxu0 %v512
    %544 = vmatpush.msra.mxu0 %v511
    %545 = vmatpush.msra.mxu0 %v510
    %546 = vmatpush.msra.mxu0 %v509
    %547 = vmatpush.msra.mxu0 %v508
    %548 = vmatpush.msra.mxu0 %v507
    %549 = vmatpush.msra.mxu0 %v506
    %550 = vmatpush.msra.mxu0 %v505
    %551 = vmatpush.msra.mxu0 %v504
    %552 = vmatmul.f32.gmra.mxu0 %v502
    %v553 = vpop.f32.mrf.mxu0
    %v554 = vadd.f32 %v530, %v553
    %555 = vdwg.mxu0
    %556 = vmatpush.msra.mxu0 0.0
    %557 = vmatpush.msra.mxu0 0.0
    %558 = vmatpush.msra.mxu0 0.0
    %559 = vmatpush.msra.mxu0 0.0
    %560 = vmatpush.msra.mxu0 0.0
    %561 = vmatpush.msra.mxu0 0.0
    %562 = vmatpush.msra.mxu0 0.0
    %563 = vmatpush.msra.mxu0 0.0
    %564 = vmatpush.msra.mxu0 %v527
    %565 = vmatpush.msra.mxu0 %v526
    %566 = vmatpush.msra.mxu0 %v525
    %567 = vmatpush.msra.mxu0 %v524
    %568 = vmatpush.msra.mxu0 %v523
    %569 = vmatpush.msra.mxu0 %v522
    %570 = vmatpush.msra.mxu0 %v521
    %571 = vmatpush.msra.mxu0 %v520
    %572 = vmatmul.f32.gmra.mxu0 %v534
    %v573 = vpop.f32.mrf.mxu0
    %v574 = vadd.f32 %v554, %v573
    %575 = vdwg.mxu0
    %v576 = vmax.f32 %v574, 0.0
    %v577 = vld [vmem:[%s5] sm:$0xff]
    %v578 = vld [vmem:[%s5 + $0x8] sm:$0xff]
    %v579 = vld [vmem:[%s5 + $0x10] sm:$0xff]
    %v580 = vld [vmem:[%s5 + $0x18] sm:$0xff]
    %v581 = vld [vmem:[%s5 + $0x20] sm:$0xff]
    %v582 = vld [vmem:[%s5 + $0x28] sm:$0xff]
    %v583 = vld [vmem:[%s5 + $0x30] sm:$0xff]
    %v584 = vld [vmem:[%s5 + $0x38] sm:$0xff]
    %v585 = vld [vmem:[%s5 + $0x40] sm:$0xff]
    %v586 = vld [vmem:[%s5 + $0x48] sm:$0xff]
    %v587 = vld [vmem:[%s5 + $0x50] sm:$0xff]
    %v588 = vld [vmem:[%s5 + $0x58] sm:$0xff]
    %v589 = vld [vmem:[%s5 + $0x60] sm:$0xff]
    %v590 = vld [vmem:[%s5 + $0x68] sm:$0xff]
    %v591 = vld [vmem:[%s5 + $0x70] sm:$0xff]
    %v592 = vld [vmem:[%s5 + $0x78] sm:$0xff]
    %v593 = vld [vmem:[%s5 + $0x80] sm:$0xff]
    %v594 = vld [vmem:[%s5 + $0x88] sm:$0xff]
    %v595 = vld [vmem:[%s5 + $0x90] sm:$0xff]
    %v596 = vld [vmem:[%s5 + $0x98] sm:$0xff]
    %v597 = vld [vmem:[%s5 + $0xa0] sm:$0xff]
    %v598 = vld [vmem:[%s5 + $0xa8] sm:$0xff]
    %v599 = vld [vmem:[%s5 + $0xb0] sm:$0xff]
    %v600 = vld [vmem:[%s5 + $0xb8] sm:$0xff]
    %v601 = vld [vmem:[%s6] sm:$0x3]
    %v603 = vperm.slane %v601, 0
    %v604 = vperm.slane %v601, 1
    %vm607 = vcmask 785408
    %v609 = vsel %vm607, %v576, 0
    %611 = vmatpush.msra.mxu0 0.0
    %612 = vmatpush.msra.mxu0 0.0
    %613 = vmatpush.msra.mxu0 0.0
    %614 = vmatpush.msra.mxu0 0.0
    %615 = vmatpush.msra.mxu0 %v599
    %616 = vmatpush.msra.mxu0 %v597
    %617 = vmatpush.msra.mxu0 %v595
    %618 = vmatpush.msra.mxu0 %v593
    %619 = vmatpush.msra.mxu0 %v591
    %620 = vmatpush.msra.mxu0 %v589
    %621 = vmatpush.msra.mxu0 %v587
    %622 = vmatpush.msra.mxu0 %v585
    %623 = vmatpush.msra.mxu0 %v583
    %624 = vmatpush.msra.mxu0 %v581
    %625 = vmatpush.msra.mxu0 %v579
    %626 = vmatpush.msra.mxu0 %v577
    %627 = vmatmul.f32.gmra.mxu0 %v609
    %v628 = vpop.f32.mrf.mxu0
    %v629 = vadd.f32 %v603, %v628
    %630 = vdwg.mxu0
    %631 = vmatpush.msra.mxu0 0.0
    %632 = vmatpush.msra.mxu0 0.0
    %633 = vmatpush.msra.mxu0 0.0
    %634 = vmatpush.msra.mxu0 0.0
    %635 = vmatpush.msra.mxu0 %v600
    %636 = vmatpush.msra.mxu0 %v598
    %637 = vmatpush.msra.mxu0 %v596
    %638 = vmatpush.msra.mxu0 %v594
    %639 = vmatpush.msra.mxu0 %v592
    %640 = vmatpush.msra.mxu0 %v590
    %641 = vmatpush.msra.mxu0 %v588
    %642 = vmatpush.msra.mxu0 %v586
    %643 = vmatpush.msra.mxu0 %v584
    %644 = vmatpush.msra.mxu0 %v582
    %645 = vmatpush.msra.mxu0 %v580
    %646 = vmatpush.msra.mxu0 %v578
    %647 = vmatmul.f32.gmra.mxu0 %v609
    %v648 = vpop.f32.mrf.mxu0
    %v649 = vadd.f32 %v604, %v648
    %650 = vdwg.mxu0
    %651 = vst [vmem:[%s7] sm:$0xff] %v629
    %652 = vst [vmem:[%s7 + $0x8] sm:$0xff] %v649
    // Predicated region
    $region38: #{forward.1} parent=1 // pred_check
      _
    $region39: #{forward.1} parent=1 // pred_check_branch
      %654 = sbr.rel (0) target = $region41
    $region40: #{forward.1} parent=1 // pred_region
      _
    $region41: #{forward.1} parent=1 // pred_fallthru
      _
    // Predicated region
    $region42: #{forward.1} parent=1 // pred_check
      _
    $region43: #{forward.1} parent=1 // pred_check_branch
      %656 = sbr.rel (0) target = $region45
    $region44: #{forward.1} parent=1 // pred_region
      _
    $region45: #{forward.1} parent=1 // pred_fallthru
      _
    %657 = vsyncpa [#allocation3], 1
    %658 = vsyncpa [#allocation5], 1

</llo_original>
